<compile_context>
chip_gen: v7x
topology: tpu7x:2x2x1
jax: 0.10.0
libtpu: 0.0.40
codegen_flags: <defaults>
</compile_context>

<pallas_src>
import jax
import jax.numpy as jnp
from jax import lax
from jax.experimental import pallas as pl
from jax.experimental.pallas import tpu as pltpu


def _round_up(x, m):
    return (x + m - 1) // m * m


# ----------------------------------------------------------------------------
# Fused kernel: conv3x3 (im2col matmul, BN scale folded) + shift + ReLU
#               + global-avg-pool (block mask matmul) + FC head.
# One grid step processes bb images (stacked along the M axis).
#   x_ref     : [Mb, Kp]      bf16  im2col patches, Mb = bb*H*W, Kp >= 9*C (lane-dense 128)
#   w_ref     : [Kp, Coutp]   bf16  folded conv weights (BN scale folded in)
#   shift_ref : [1, Coutp]    f32   folded BN shift
#   pool_ref  : [bb, Mb]      f32   block-diagonal 1/(H*W) pooling matrix
#   fcw_ref   : [Coutp, NCp]  bf16  classifier weights (zero padded)
#   fcb_ref   : [1, NCp]      f32   classifier bias    (zero padded)
#   o_ref     : [bb, NCp]     f32   padded logits for this image block
# ----------------------------------------------------------------------------
def _fused_kernel(x_ref, w_ref, shift_ref, pool_ref, fcw_ref, fcb_ref, o_ref):
    # Single full-depth bf16 MXU matmul with f32 accumulation.
    conv = jnp.dot(x_ref[...], w_ref[...],
                   preferred_element_type=jnp.float32)            # [Mb, Coutp]
    # Folded-BN shift + ReLU epilogue (f32 VPU, lane-dense Coutp).
    y = jnp.maximum(conv + shift_ref[...], 0.0)                   # [Mb, Coutp]
    # Per-image global average pool as a block mask matmul on the MXU;
    # the [Mb, Coutp] feature map never touches HBM.
    pooled = jnp.dot(pool_ref[...], y,
                     preferred_element_type=jnp.float32)          # [bb, Coutp]
    # Fused classifier head (bf16 weights, f32 accumulation).
    o_ref[...] = (jnp.dot(pooled.astype(jnp.bfloat16), fcw_ref[...],
                          preferred_element_type=jnp.float32)
                  + fcb_ref[...])                                 # [bb, NCp]


def fused_conv_pool_head(x_blocks, w, shift, pool, fcw, fcb):
    G, Mb, Kp = x_blocks.shape
    Coutp = w.shape[1]
    bb = pool.shape[0]
    NCp = fcw.shape[1]
    out = pl.pallas_call(
        _fused_kernel,
        out_shape=jax.ShapeDtypeStruct((G, bb, NCp), jnp.float32),
        grid_spec=pltpu.PrefetchScalarGridSpec(
            num_scalar_prefetch=0,
            grid=(G,),
            in_specs=[
                pl.BlockSpec((None, Mb, Kp), lambda g: (g, 0, 0)),   # im2col block g
                pl.BlockSpec((Kp, Coutp), lambda g: (0, 0)),         # conv weights
                pl.BlockSpec((1, Coutp), lambda g: (0, 0)),          # BN shift
                pl.BlockSpec((bb, Mb), lambda g: (0, 0)),            # pool matrix
                pl.BlockSpec((Coutp, NCp), lambda g: (0, 0)),        # fc weights
                pl.BlockSpec((1, NCp), lambda g: (0, 0)),            # fc bias
            ],
            out_specs=pl.BlockSpec((None, bb, NCp), lambda g: (g, 0, 0)),
        ),
        compiler_params=pltpu.CompilerParams(
            dimension_semantics=("parallel",)),     # v7x: 2 TCs split the grid
    )(x_blocks, w, shift, pool, fcw, fcb)
    return out.reshape(G * bb, NCp)


def _pick_bb(B, H, W, Kp, coutp, vmem_budget_bytes=6 * 1024 * 1024):
    """Images per grid step: amortize per-step overhead but keep >= 2 grid
    steps when possible (v7x has 2 TensorCores) and stay inside a VMEM budget."""
    per_img_bytes = H * W * (Kp * 2 + coutp * 4)        # bf16 lhs + f32 conv out
    max_bb_vmem = max(1, vmem_budget_bytes // max(1, per_img_bytes))
    target = max(1, B // 2) if B >= 2 else 1
    bb = max(1, min(target, max_bb_vmem, B))
    while B % bb != 0:                                   # must divide the batch
        bb -= 1
    return bb


# ----------------------------------------------------------------------------
# Model wrapper (equivalent of TimmModel.forward)
# ----------------------------------------------------------------------------
class PallasTimmModel:
    def __init__(self, in_chans=4, width=32, num_classes=8, key=jax.random.PRNGKey(0)):
        k1, k2, k3, k4, k5, k6 = jax.random.split(key, 6)
        self.in_chans = in_chans
        self.width = width
        self.num_classes = num_classes
        # Raw parameters (timm conventions: conv has no bias, BN supplies affine).
        self.conv_w = 0.1 * jax.random.normal(k1, (3, 3, in_chans, width), jnp.float32)
        self.bn_gamma = 1.0 + 0.05 * jax.random.normal(k2, (width,), jnp.float32)
        self.bn_beta = 0.05 * jax.random.normal(k3, (width,), jnp.float32)
        self.bn_mean = 0.02 * jax.random.normal(k4, (width,), jnp.float32)
        self.bn_var = jnp.abs(1.0 + 0.05 * jax.random.normal(k5, (width,), jnp.float32))
        self.bn_eps = 1e-5
        self.fc_w = 0.1 * jax.random.normal(k6, (width, num_classes), jnp.float32)
        self.fc_b = jnp.zeros((1, num_classes), jnp.float32)

        # ---- One-time folding / padding of parameters for the kernel ----
        self.kp = max(128, _round_up(9 * in_chans, 128))   # lane-dense contraction dim
        self.coutp = _round_up(width, 128)                  # lane-dense conv channels
        self.ncp = _round_up(num_classes, 128)              # lane-dense logits store
        scale = self.bn_gamma / jnp.sqrt(self.bn_var + self.bn_eps)
        shift = self.bn_beta - self.bn_mean * scale
        w_folded = self.conv_w * scale[None, None, None, :]   # fold BN scale into conv
        w2d = w_folded.reshape(9 * in_chans, width)           # tap-major, channel-minor
        self.w_p = (jnp.zeros((self.kp, self.coutp), jnp.float32)
                    .at[:9 * in_chans, :width].set(w2d)
                    .astype(jnp.bfloat16))
        self.shift_p = jnp.zeros((1, self.coutp), jnp.float32).at[0, :width].set(shift)
        self.fcw_p = (jnp.zeros((self.coutp, self.ncp), jnp.float32)
                      .at[:width, :num_classes].set(self.fc_w)
                      .astype(jnp.bfloat16))
        self.fcb_p = (jnp.zeros((1, self.ncp), jnp.float32)
                      .at[0, :num_classes].set(self.fc_b[0]))

    def __call__(self, x_nchw):
        B, C, H, W = x_nchw.shape
        assert C == self.in_chans
        M = H * W
        # NCHW -> NHWC, 'SAME' zero pad, im2col to a lane-dense [B, M, Kp] lhs.
        # For toy/small images the 9x blow-up is negligible; DMAs are contiguous.
        x_nhwc = jnp.transpose(x_nchw, (0, 2, 3, 1)).astype(jnp.float32)
        xp = jnp.pad(x_nhwc, ((0, 0), (1, 1), (1, 1), (0, 0)))
        patches = [xp[:, dh:dh + H, dw:dw + W, :]
                   for dh in range(3) for dw in range(3)]            # tap-major
        x_i2c = jnp.concatenate(patches, axis=-1).reshape(B, M, 9 * C)
        x_i2c = jnp.pad(x_i2c, ((0, 0), (0, 0), (0, self.kp - 9 * C)))
        x_i2c = x_i2c.astype(jnp.bfloat16)

        # Batch blocking: bb images per grid step, grid kept >= 2 steps when possible.
        bb = _pick_bb(B, H, W, self.kp, self.coutp)
        G = B // bb
        x_blocks = x_i2c.reshape(G, bb * M, self.kp)
        # Block-diagonal pooling matrix: row i averages the M rows of image i.
        pool = jnp.kron(jnp.eye(bb, dtype=jnp.float32),
                        jnp.full((1, M), 1.0 / M, jnp.float32))       # [bb, bb*M]

        logits_p = fused_conv_pool_head(x_blocks, self.w_p, self.shift_p, pool,
                                        self.fcw_p, self.fcb_p)       # [B, NCp]
        return logits_p[:, :self.num_classes]

    # Pure-JAX reference (same bf16-storage / f32-accumulate choices as the kernel).
    def reference(self, x_nchw):
        x_nhwc = jnp.transpose(x_nchw, (0, 2, 3, 1)).astype(jnp.float32)
        xq = x_nhwc.astype(jnp.bfloat16).astype(jnp.float32)
        scale = self.bn_gamma / jnp.sqrt(self.bn_var + self.bn_eps)
        shift = self.bn_beta - self.bn_mean * scale
        wq = (self.conv_w * scale[None, None, None, :]).astype(jnp.bfloat16).astype(jnp.float32)
        y = lax.conv_general_dilated(
            xq, wq, window_strides=(1, 1), padding='SAME',
            dimension_numbers=('NHWC', 'HWIO', 'NHWC'),
            precision=lax.Precision.HIGHEST)
        y = jnp.maximum(y + shift, 0.0)
        pooled = y.mean(axis=(1, 2))
        pooled_q = pooled.astype(jnp.bfloat16).astype(jnp.float32)
        fcw_q = self.fc_w.astype(jnp.bfloat16).astype(jnp.float32)
        return jnp.dot(pooled_q, fcw_q, precision=lax.Precision.HIGHEST) + self.fc_b


if __name__ == "__main__":
    key = jax.random.PRNGKey(0)
    kx, kp = jax.random.split(key)
    B, C, H, W = 2, 4, 16, 16                       # NCHW input (PyTorch convention)
    x = jax.random.normal(kx, (B, C, H, W), jnp.float32)

    model = PallasTimmModel(in_chans=C, width=32, num_classes=8, key=kp)

    logits = jax.block_until_ready(model(x))
    ref = model.reference(x)

    assert logits.shape == (B, 8)
    assert jnp.allclose(logits, ref, atol=2e-3, rtol=2e-3), "mismatch vs reference"

    print("KERNEL_OK")
</pallas_src>

<mosaic_0001>
module attributes {stable_mosaic.version = 11 : i64} {
  func.func @_fused_kernel(%arg0: i32, %arg1: memref<1x256x128xbf16, #tpu.memory_space<vmem>>, %arg2: memref<128x128xbf16, #tpu.memory_space<vmem>>, %arg3: memref<1x128xf32, #tpu.memory_space<vmem>>, %arg4: memref<1x256xf32, #tpu.memory_space<vmem>>, %arg5: memref<128x128xbf16, #tpu.memory_space<vmem>>, %arg6: memref<1x128xf32, #tpu.memory_space<vmem>>, %arg7: memref<1x1x128xf32, #tpu.memory_space<vmem>>) attributes {dimension_semantics = [#tpu.dimension_semantics<parallel>], iteration_bounds = array<i64: 2>, scalar_prefetch = 0 : i64, scratch_operands = 0 : i64, tpu.core_type = #tpu.core_type<tc>, window_params = [{transform_indices = @transform_0, window_bounds = array<i64: 1, 256, 128>}, {pipeline_mode = #tpu.pipeline_mode<synchronous>, transform_indices = @transform_1, window_bounds = array<i64: 128, 128>}, {pipeline_mode = #tpu.pipeline_mode<synchronous>, transform_indices = @transform_2, window_bounds = array<i64: 1, 128>}, {pipeline_mode = #tpu.pipeline_mode<synchronous>, transform_indices = @transform_3, window_bounds = array<i64: 1, 256>}, {pipeline_mode = #tpu.pipeline_mode<synchronous>, transform_indices = @transform_4, window_bounds = array<i64: 128, 128>}, {pipeline_mode = #tpu.pipeline_mode<synchronous>, transform_indices = @transform_5, window_bounds = array<i64: 1, 128>}, {transform_indices = @transform_6, window_bounds = array<i64: 1, 1, 128>}]} {
    %c0 = arith.constant 0 : index
    %c0_0 = arith.constant 0 : index
    %c0_1 = arith.constant 0 : index
    %0 = vector.load %arg1[%c0, %c0_0, %c0_1] : memref<1x256x128xbf16, #tpu.memory_space<vmem>>, vector<1x256x128xbf16>
    %1 = vector.shape_cast %0 : vector<1x256x128xbf16> to vector<256x128xbf16>
    %c0_2 = arith.constant 0 : index
    %c0_3 = arith.constant 0 : index
    %2 = vector.load %arg2[%c0_2, %c0_3] : memref<128x128xbf16, #tpu.memory_space<vmem>>, vector<128x128xbf16>
    %cst = arith.constant dense<0.000000e+00> : vector<256x128xf32>
    %3 = tpu.matmul %1, %2, %cst {dimension_numbers = #tpu.dot_dimension_numbers<[1], [0], [0], [1], [0, 0, 1, 1], [], []>} : vector<256x128xbf16>, vector<128x128xbf16>, vector<256x128xf32> -> vector<256x128xf32>
    %c0_4 = arith.constant 0 : index
    %c0_5 = arith.constant 0 : index
    %4 = vector.load %arg3[%c0_4, %c0_5] : memref<1x128xf32, #tpu.memory_space<vmem>>, vector<1x128xf32>
    %5 = vector.broadcast %4 : vector<1x128xf32> to vector<256x128xf32>
    %6 = arith.addf %3, %5 : vector<256x128xf32>
    %cst_6 = arith.constant 0.000000e+00 : f32
    %7 = vector.broadcast %cst_6 : f32 to vector<256x128xf32>
    %8 = arith.maximumf %6, %7 : vector<256x128xf32>
    %c0_7 = arith.constant 0 : index
    %c0_8 = arith.constant 0 : index
    %9 = vector.load %arg4[%c0_7, %c0_8] : memref<1x256xf32, #tpu.memory_space<vmem>>, vector<1x256xf32>
    %cst_9 = arith.constant dense<0.000000e+00> : vector<1x128xf32>
    %10 = tpu.matmul %9, %8, %cst_9 {dimension_numbers = #tpu.dot_dimension_numbers<[1], [0], [0], [1], [0, 0, 1, 1], [], []>} : vector<1x256xf32>, vector<256x128xf32>, vector<1x128xf32> -> vector<1x128xf32>
    %11 = arith.truncf %10 : vector<1x128xf32> to vector<1x128xbf16>
    %c0_10 = arith.constant 0 : index
    %c0_11 = arith.constant 0 : index
    %12 = vector.load %arg5[%c0_10, %c0_11] : memref<128x128xbf16, #tpu.memory_space<vmem>>, vector<128x128xbf16>
    %cst_12 = arith.constant dense<0.000000e+00> : vector<1x128xf32>
    %13 = tpu.matmul %11, %12, %cst_12 {dimension_numbers = #tpu.dot_dimension_numbers<[1], [0], [0], [1], [0, 0, 1, 1], [], []>} : vector<1x128xbf16>, vector<128x128xbf16>, vector<1x128xf32> -> vector<1x128xf32>
    %c0_13 = arith.constant 0 : index
    %c0_14 = arith.constant 0 : index
    %14 = vector.load %arg6[%c0_13, %c0_14] : memref<1x128xf32, #tpu.memory_space<vmem>>, vector<1x128xf32>
    %15 = arith.addf %13, %14 : vector<1x128xf32>
    %c0_15 = arith.constant 0 : index
    %c0_16 = arith.constant 0 : index
    %c0_17 = arith.constant 0 : index
    %16 = vector.load %arg7[%c0_15, %c0_16, %c0_17] : memref<1x1x128xf32, #tpu.memory_space<vmem>>, vector<1x1x128xf32>
    %17 = vector.shape_cast %16 : vector<1x1x128xf32> to vector<1x128xf32>
    %18 = vector.shape_cast %15 : vector<1x128xf32> to vector<1x1x128xf32>
    tpu.vector_store %arg7[%c0_15, %c0_16, %c0_17], %18 {strides = array<i32>} : memref<1x1x128xf32, #tpu.memory_space<vmem>>, vector<1x1x128xf32>,
    return
  }
  func.func @transform_0(%arg0: i32) -> (i32, i32, i32) {
    %c0_i32 = arith.constant 0 : i32
    %c0_i32_0 = arith.constant 0 : i32
    %c0_i32_1 = arith.constant 0 : i32
    return %arg0, %c0_i32, %c0_i32_0 : i32, i32, i32
  }
  func.func @transform_1(%arg0: i32) -> (i32, i32) {
    %c0_i32 = arith.constant 0 : i32
    %c0_i32_0 = arith.constant 0 : i32
    %c0_i32_1 = arith.constant 0 : i32
    return %c0_i32, %c0_i32_0 : i32, i32
  }
  func.func @transform_2(%arg0: i32) -> (i32, i32) {
    %c0_i32 = arith.constant 0 : i32
    %c0_i32_0 = arith.constant 0 : i32
    %c0_i32_1 = arith.constant 0 : i32
    return %c0_i32, %c0_i32_0 : i32, i32
  }
  func.func @transform_3(%arg0: i32) -> (i32, i32) {
    %c0_i32 = arith.constant 0 : i32
    %c0_i32_0 = arith.constant 0 : i32
    %c0_i32_1 = arith.constant 0 : i32
    return %c0_i32, %c0_i32_0 : i32, i32
  }
  func.func @transform_4(%arg0: i32) -> (i32, i32) {
    %c0_i32 = arith.constant 0 : i32
    %c0_i32_0 = arith.constant 0 : i32
    %c0_i32_1 = arith.constant 0 : i32
    return %c0_i32, %c0_i32_0 : i32, i32
  }
  func.func @transform_5(%arg0: i32) -> (i32, i32) {
    %c0_i32 = arith.constant 0 : i32
    %c0_i32_0 = arith.constant 0 : i32
    %c0_i32_1 = arith.constant 0 : i32
    return %c0_i32, %c0_i32_0 : i32, i32
  }
  func.func @transform_6(%arg0: i32) -> (i32, i32, i32) {
    %c0_i32 = arith.constant 0 : i32
    %c0_i32_0 = arith.constant 0 : i32
    %c0_i32_1 = arith.constant 0 : i32
    return %arg0, %c0_i32, %c0_i32_0 : i32, i32, i32
  }
}

</mosaic_0001>

<llo_original>
// kernel: tpu_custom_call.1
$region0: #{tpu_custom_call.1}
  #allocation0 [shape = 'u32[]', space=smem, size = 0x4, offset = 0x4, fixed_abs, tag = 'smem constant byte address 0x4 - core index']
  #allocation1 [shape = 'u32[144,128]{1,0:T(1,128)}', space=vmem, size = 0x12000, scoped, tag = 'internal scratch']
  %s0 = inlined_call_operand.hbm [shape: bf16[2,256,128], index: 0, kind: input, shape index: {}]
  %s1 = inlined_call_operand.hbm [shape: bf16[128,128], index: 1, kind: input, shape index: {}]
  %s2 = inlined_call_operand.vmem [shape: f32[1,128], index: 2, kind: input, shape index: {}]
  %s3 = inlined_call_operand.vmem [shape: f32[1,256], index: 3, kind: input, shape index: {}]
  %s4 = inlined_call_operand.hbm [shape: bf16[128,128], index: 4, kind: input, shape index: {}]
  %s5 = inlined_call_operand.vmem [shape: f32[1,128], index: 5, kind: input, shape index: {}]
  %s6 = inlined_call_operand.hbm [shape: f32[2,1,128], index: 6, kind: output, shape index: {}]
  %s7 = sld [smem:[#allocation0]]
  $region69: #{tpu_custom_call.1} parent=0
    _
  %s9 = ssub.s32 1, %s7
  %s10 = scalar_select 0, %s9, %s7
  $region1: #{tpu_custom_call.1} parent=0
    #allocation2 [shape = 'u8[131072]{0}', space=vmem, size = 0x20000, scoped, tag = 'input window, operand 0']
    #allocation3 [shape = 's32[2]{0}', space=sflag, size = 0x8, scoped, tag = 'scoped memory for tpu_custom_call.1']
    #allocation4 [shape = 's32[2]{0}', space=sflag, size = 0x8, scoped, tag = 'scoped memory for tpu_custom_call.1']
    #allocation5 [shape = 'u8[32768]{0}', space=vmem, size = 0x8000, scoped, tag = 'input window, operand 1, single buffered']
    #allocation6 [shape = 's32[1]{0}', space=sflag, size = 0x4, scoped, tag = 'scoped memory for tpu_custom_call.1']
    #allocation7 [shape = 'u8[32768]{0}', space=vmem, size = 0x8000, scoped, tag = 'input window, operand 4, single buffered']
    #allocation8 [shape = 'u8[1024]{0}', space=vmem, size = 0x400, scoped, tag = 'output window, operand 0']
    %11 = vsyncpa [#allocation3], 0
    %s12 = scalar_lea.sflag [#allocation3], 1
    %13 = vsyncpa %s12, 0
    %14 = vsyncpa [#allocation6], 0
    %15 = vsyncpa [#allocation4], 0
    %s16 = scalar_lea.sflag [#allocation4], 1
    %17 = vsyncpa %s16, 0
    loop: start=0, step=1, limit=4
    $region2: #{tpu_custom_call.1} parent=1 // loop_pre_header
      _
    $region3: #{tpu_custom_call.1} parent=1 // loop_header
      %s19 = sphi 0, %s23
      %p20 = scmp.ge.s32.totalorder %s19, 4
      %s29 = sphi 0, %s31
      %s32 = sphi 0, %s29
      %s33 = sphi 0, %s32
      %s49 = sphi 0, %s33
      %s53 = sphi 0, %s53
      %s55 = sphi 0, %s53
      %s56 = sphi 0, %s55
      %s70 = sphi 0, %s56
      %s74 = sphi 0, %s74
      %s76 = sphi 0, %s74
      %s77 = sphi 0, %s76
      %s91 = sphi 0, %s77
      %s95 = sphi 0, %s95
      %s97 = sphi 0, %s95
      %s98 = sphi 0, %s97
      %s112 = sphi 0, %s98
      %s116 = sphi 0, %s116
      %s118 = sphi 0, %s116
      %s119 = sphi 0, %s118
      %s133 = sphi 0, %s119
      %s137 = sphi 0, %s137
      %s139 = sphi 0, %s137
      %s140 = sphi 0, %s139
      %s154 = sphi 0, %s140
      %s160 = sphi 0, %s162
      %s163 = sphi 0, %s160
      %s164 = sphi 0, %s163
      %s180 = sphi 0, %s164
    $region4: #{tpu_custom_call.1} parent=1 // loop_header_branch
      %22 = sbr.rel (%p20) target = $region8
    $region5: #{tpu_custom_call.1} parent=1 // loop_body
      %s24 = ssub.s32 %s19, 1
      %s25 = ssub.s32 %s19, 2
      %s26 = sadd.s32 %s19, 1
      %s27 = ssub.s32 %s19, %s26
      %p28 = scmp.eq.s32.totalorder %s27, 0
      %s30 = sadd.s32 %s29, 1
      %s31 = scalar_select %p28, %s29, %s30
      %p34 = pneg %p28
      %p35 = scmp.eq.s32.totalorder %s19, 1
      %p36 = por %p34, %p35
      %p37 = scmp.ne.s32.totalorder %s29, %s32
      %p38 = scmp.eq.s32.totalorder %s19, 0
      %p39 = por %p37, %p38
      %p40 = scmp.ne.s32.totalorder %s29, %s32
      %p41 = scmp.eq.s32.totalorder %s24, 1
      %p42 = por %p40, %p41
      %p43 = scmp.ne.s32.totalorder %s32, %s33
      %p44 = scmp.eq.s32.totalorder %s24, 0
      %p45 = por %p43, %p44
      %p46 = scmp.ne.s32.totalorder %s32, %s33
      %p47 = scmp.eq.s32.totalorder %s25, 1
      %p48 = por %p46, %p47
      %p50 = scmp.ne.s32.totalorder %s33, %s49
      %p51 = scmp.eq.s32.totalorder %s25, 0
      %p52 = por %p50, %p51
      %s54 = sadd.s32 %s53, 1
      %p57 = scmp.eq.s32.totalorder %s19, 1
      %p58 = scmp.ne.s32.totalorder %s53, %s55
      %p59 = scmp.eq.s32.totalorder %s19, 0
      %p60 = por %p58, %p59
      %p61 = scmp.ne.s32.totalorder %s53, %s55
      %p62 = scmp.eq.s32.totalorder %s24, 1
      %p63 = por %p61, %p62
      %p64 = scmp.ne.s32.totalorder %s55, %s56
      %p65 = scmp.eq.s32.totalorder %s24, 0
      %p66 = por %p64, %p65
      %p67 = scmp.ne.s32.totalorder %s55, %s56
      %p68 = scmp.eq.s32.totalorder %s25, 1
      %p69 = por %p67, %p68
      %p71 = scmp.ne.s32.totalorder %s56, %s70
      %p72 = scmp.eq.s32.totalorder %s25, 0
      %p73 = por %p71, %p72
      %s75 = sadd.s32 %s74, 1
      %p78 = scmp.eq.s32.totalorder %s19, 1
      %p79 = scmp.ne.s32.totalorder %s74, %s76
      %p80 = scmp.eq.s32.totalorder %s19, 0
      %p81 = por %p79, %p80
      %p82 = scmp.ne.s32.totalorder %s74, %s76
      %p83 = scmp.eq.s32.totalorder %s24, 1
      %p84 = por %p82, %p83
      %p85 = scmp.ne.s32.totalorder %s76, %s77
      %p86 = scmp.eq.s32.totalorder %s24, 0
      %p87 = por %p85, %p86
      %p88 = scmp.ne.s32.totalorder %s76, %s77
      %p89 = scmp.eq.s32.totalorder %s25, 1
      %p90 = por %p88, %p89
      %p92 = scmp.ne.s32.totalorder %s77, %s91
      %p93 = scmp.eq.s32.totalorder %s25, 0
      %p94 = por %p92, %p93
      %s96 = sadd.s32 %s95, 1
      %p99 = scmp.eq.s32.totalorder %s19, 1
      %p100 = scmp.ne.s32.totalorder %s95, %s97
      %p101 = scmp.eq.s32.totalorder %s19, 0
      %p102 = por %p100, %p101
      %p103 = scmp.ne.s32.totalorder %s95, %s97
      %p104 = scmp.eq.s32.totalorder %s24, 1
      %p105 = por %p103, %p104
      %p106 = scmp.ne.s32.totalorder %s97, %s98
      %p107 = scmp.eq.s32.totalorder %s24, 0
      %p108 = por %p106, %p107
      %p109 = scmp.ne.s32.totalorder %s97, %s98
      %p110 = scmp.eq.s32.totalorder %s25, 1
      %p111 = por %p109, %p110
      %p113 = scmp.ne.s32.totalorder %s98, %s112
      %p114 = scmp.eq.s32.totalorder %s25, 0
      %p115 = por %p113, %p114
      %s117 = sadd.s32 %s116, 1
      %p120 = scmp.eq.s32.totalorder %s19, 1
      %p121 = scmp.ne.s32.totalorder %s116, %s118
      %p122 = scmp.eq.s32.totalorder %s19, 0
      %p123 = por %p121, %p122
      %p124 = scmp.ne.s32.totalorder %s116, %s118
      %p125 = scmp.eq.s32.totalorder %s24, 1
      %p126 = por %p124, %p125
      %p127 = scmp.ne.s32.totalorder %s118, %s119
      %p128 = scmp.eq.s32.totalorder %s24, 0
      %p129 = por %p127, %p128
      %p130 = scmp.ne.s32.totalorder %s118, %s119
      %p131 = scmp.eq.s32.totalorder %s25, 1
      %p132 = por %p130, %p131
      %p134 = scmp.ne.s32.totalorder %s119, %s133
      %p135 = scmp.eq.s32.totalorder %s25, 0
      %p136 = por %p134, %p135
      %s138 = sadd.s32 %s137, 1
      %p141 = scmp.eq.s32.totalorder %s19, 1
      %p142 = scmp.ne.s32.totalorder %s137, %s139
      %p143 = scmp.eq.s32.totalorder %s19, 0
      %p144 = por %p142, %p143
      %p145 = scmp.ne.s32.totalorder %s137, %s139
      %p146 = scmp.eq.s32.totalorder %s24, 1
      %p147 = por %p145, %p146
      %p148 = scmp.ne.s32.totalorder %s139, %s140
      %p149 = scmp.eq.s32.totalorder %s24, 0
      %p150 = por %p148, %p149
      %p151 = scmp.ne.s32.totalorder %s139, %s140
      %p152 = scmp.eq.s32.totalorder %s25, 1
      %p153 = por %p151, %p152
      %p155 = scmp.ne.s32.totalorder %s140, %s154
      %p156 = scmp.eq.s32.totalorder %s25, 0
      %p157 = por %p155, %p156
      %s158 = ssub.s32 %s19, %s26
      %p159 = scmp.eq.s32.totalorder %s158, 0
      %s161 = sadd.s32 %s160, 1
      %s162 = scalar_select %p159, %s160, %s161
      %p165 = pneg %p159
      %p166 = scmp.eq.s32.totalorder %s19, 1
      %p167 = por %p165, %p166
      %p168 = scmp.ne.s32.totalorder %s160, %s163
      %p169 = scmp.eq.s32.totalorder %s19, 0
      %p170 = por %p168, %p169
      %p171 = scmp.ne.s32.totalorder %s160, %s163
      %p172 = scmp.eq.s32.totalorder %s24, 1
      %p173 = por %p171, %p172
      %p174 = scmp.ne.s32.totalorder %s163, %s164
      %p175 = scmp.eq.s32.totalorder %s24, 0
      %p176 = por %p174, %p175
      %p177 = scmp.ne.s32.totalorder %s163, %s164
      %p178 = scmp.eq.s32.totalorder %s25, 1
      %p179 = por %p177, %p178
      %p181 = scmp.ne.s32.totalorder %s164, %s180
      %p182 = scmp.eq.s32.totalorder %s25, 0
      %p183 = por %p181, %p182
      %p184 = scmp.le.s32.totalorder 1, %s19
      %p185 = scmp.lt.s32.totalorder %s19, 3
      %p186 = pnand %p184, %p185
      %p187 = pneg %p186
      // Predicated region
      $region9: #{tpu_custom_call.1} parent=5 // pred_check
        _
      $region10: #{tpu_custom_call.1} parent=5 // pred_check_branch
        %189 = sbr.rel (%p186) target = $region12
      $region11: #{tpu_custom_call.1} parent=5 // pred_region
        %s190 = ssub.s32 %s19, 1
        // Predicated region
        $region13: #{tpu_custom_call.1} parent=11 // pred_check
          %p191 = pneg %p66
        $region14: #{tpu_custom_call.1} parent=11 // pred_check_branch
          %193 = sbr.rel (%p191) target = $region16
        $region15: #{tpu_custom_call.1} parent=11 // pred_region
          %s195 = ssub.s32 1024, 1024
          %196 = vsyncadd [#allocation6], %s195
          %s197 = sshll.u32 [#allocation5], 4
          %s198 = int_to_ptr.vmem [resolvable:$true] %s197
          %203 = dma.hbm_to_vmem [thread:$0]  %s1, 1024, %s198, [#allocation6], 64, 64, 4
        $region16: #{tpu_custom_call.1} parent=11 // pred_fallthru
          _
        // Predicated region
        $region17: #{tpu_custom_call.1} parent=11 // pred_check
          %p204 = pneg %p87
        $region18: #{tpu_custom_call.1} parent=11 // pred_check_branch
          %206 = sbr.rel (%p204) target = $region20
        $region19: #{tpu_custom_call.1} parent=11 // pred_region
          _
        $region20: #{tpu_custom_call.1} parent=11 // pred_fallthru
          _
        // Predicated region
        $region21: #{tpu_custom_call.1} parent=11 // pred_check
          %p207 = pneg %p108
        $region22: #{tpu_custom_call.1} parent=11 // pred_check_branch
          %209 = sbr.rel (%p207) target = $region24
        $region23: #{tpu_custom_call.1} parent=11 // pred_region
          _
        $region24: #{tpu_custom_call.1} parent=11 // pred_fallthru
          _
        // Predicated region
        $region25: #{tpu_custom_call.1} parent=11 // pred_check
          %p210 = pneg %p129
        $region26: #{tpu_custom_call.1} parent=11 // pred_check_branch
          %212 = sbr.rel (%p210) target = $region28
        $region27: #{tpu_custom_call.1} parent=11 // pred_region
          %s214 = ssub.s32 1024, 1024
          %215 = vsyncadd [#allocation6], %s214
          %s216 = sshll.u32 [#allocation7], 4
          %s217 = int_to_ptr.vmem [resolvable:$true] %s216
          %222 = dma.hbm_to_vmem [thread:$0]  %s4, 1024, %s217, [#allocation6], 64, 64, 4
        $region28: #{tpu_custom_call.1} parent=11 // pred_fallthru
          _
        // Predicated region
        $region29: #{tpu_custom_call.1} parent=11 // pred_check
          %p223 = pneg %p150
        $region30: #{tpu_custom_call.1} parent=11 // pred_check_branch
          %225 = sbr.rel (%p223) target = $region32
        $region31: #{tpu_custom_call.1} parent=11 // pred_region
          _
        $region32: #{tpu_custom_call.1} parent=11 // pred_fallthru
          _
      $region12: #{tpu_custom_call.1} parent=5 // pred_fallthru
        _
      %p226 = scmp.lt.s32.totalorder %s19, 2
      // Predicated region
      $region33: #{tpu_custom_call.1} parent=5 // pred_check
        %p227 = pneg %p226
      $region34: #{tpu_custom_call.1} parent=5 // pred_check_branch
        %229 = sbr.rel (%p227) target = $region36
      $region35: #{tpu_custom_call.1} parent=5 // pred_region
        // Predicated region
        $region37: #{tpu_custom_call.1} parent=35 // pred_check
          %p230 = pneg %p39
        $region38: #{tpu_custom_call.1} parent=35 // pred_check_branch
          %232 = sbr.rel (%p230) target = $region40
        $region39: #{tpu_custom_call.1} parent=35 // pred_region
          %s233 = sand.u32 %s29, 1
          %s234 = scalar_lea.sflag [#allocation3], %s233
          %s235 = sand.u32 %s29, 1
          %s236 = smul.addr %s235, 128
          %s237 = scalar_lea.vmem [#allocation2], %s236
          %s239 = ssub.s32 2048, 2048
          %240 = vsyncadd %s234, %s239
          %s241 = smul.addr %s19, 32
          %s242 = smul.addr %s241, 64
          %s243 = scalar_lea.hbm %s0, %s242
          %s244 = sshll.u32 %s237, 4
          %s245 = int_to_ptr.vmem [resolvable:$true] %s244
          %250 = dma.hbm_to_vmem [thread:$0]  %s243, 2048, %s245, %s234, 64, 64, 4
        $region40: #{tpu_custom_call.1} parent=35 // pred_fallthru
          _
      $region36: #{tpu_custom_call.1} parent=5 // pred_fallthru
        _
      %p251 = scmp.le.s32.totalorder 1, %s19
      %p252 = scmp.lt.s32.totalorder %s19, 3
      %p253 = pnand %p251, %p252
      %p254 = pneg %p253
      // Predicated region
      $region41: #{tpu_custom_call.1} parent=5 // pred_check
        _
      $region42: #{tpu_custom_call.1} parent=5 // pred_check_branch
        %256 = sbr.rel (%p253) target = $region44
      $region43: #{tpu_custom_call.1} parent=5 // pred_region
        %s257 = ssub.s32 %s19, 1
        %s258 = sand.u32 %s32, 1
        %s259 = scalar_lea.sflag [#allocation3], %s258
        %s260 = sand.u32 %s32, 1
        %s261 = smul.addr %s260, 128
        %s262 = scalar_lea.vmem [#allocation2], %s261
        // Predicated region
        $region45: #{tpu_custom_call.1} parent=43 // pred_check
          %p263 = pneg %p45
        $region46: #{tpu_custom_call.1} parent=43 // pred_check_branch
          %265 = sbr.rel (%p263) target = $region48
        $region47: #{tpu_custom_call.1} parent=43 // pred_region
          %266 = dma.done %s259, 2048
        $region48: #{tpu_custom_call.1} parent=43 // pred_fallthru
          _
        // Predicated region
        $region49: #{tpu_custom_call.1} parent=43 // pred_check
          %p267 = pneg %p66
        $region50: #{tpu_custom_call.1} parent=43 // pred_check_branch
          %269 = sbr.rel (%p267) target = $region52
        $region51: #{tpu_custom_call.1} parent=43 // pred_region
          %270 = dma.done [#allocation6], 1024
        $region52: #{tpu_custom_call.1} parent=43 // pred_fallthru
          _
        // Predicated region
        $region53: #{tpu_custom_call.1} parent=43 // pred_check
          %p271 = pneg %p129
        $region54: #{tpu_custom_call.1} parent=43 // pred_check_branch
          %273 = sbr.rel (%p271) target = $region56
        $region55: #{tpu_custom_call.1} parent=43 // pred_region
          %274 = dma.done [#allocation6], 1024
        $region56: #{tpu_custom_call.1} parent=43 // pred_fallthru
          _
        %s275 = sand.u32 %s32, 1
        %s276 = scalar_lea.sflag [#allocation3], %s275
        %s277 = sand.u32 %s32, 1
        %s278 = smul.addr %s277, 128
        %s279 = scalar_lea.vmem [#allocation2], %s278
        %p280 = pneg %p45
        %p281 = pneg %p42
        %p282 = pneg %p66
        %p283 = pneg %p63
        %p284 = pneg %p87
        %p285 = pneg %p84
        %p286 = pneg %p108
        %p287 = pneg %p105
        %p288 = pneg %p129
        %p289 = pneg %p126
        %p290 = pneg %p150
        %p291 = pneg %p147
        %p292 = pneg %p176
        %p293 = pneg %p173
        %s294 = sand.u32 %s163, 1
        %s295 = scalar_lea.sflag [#allocation4], %s294
        %s296 = sand.u32 %s163, 1
        %s297 = scalar_lea.vmem [#allocation8], %s296
        %v299 = vld [vmem:[%s262] sm:$0xf]
        %v300 = vld [vmem:[%s262 + $0x4] sm:$0xf]
        %v301 = vld [vmem:[%s262 + $0x8] sm:$0xf]
        %v302 = vld [vmem:[%s262 + $0xc] sm:$0xf]
        %v303 = vld [vmem:[%s262 + $0x10] sm:$0xf]
        %v304 = vld [vmem:[%s262 + $0x14] sm:$0xf]
        %v305 = vld [vmem:[%s262 + $0x18] sm:$0xf]
        %v306 = vld [vmem:[%s262 + $0x1c] sm:$0xf]
        %v307 = vld [vmem:[%s262 + $0x20] sm:$0xf]
        %v308 = vld [vmem:[%s262 + $0x24] sm:$0xf]
        %v309 = vld [vmem:[%s262 + $0x28] sm:$0xf]
        %v310 = vld [vmem:[%s262 + $0x2c] sm:$0xf]
        %v311 = vld [vmem:[%s262 + $0x30] sm:$0xf]
        %v312 = vld [vmem:[%s262 + $0x34] sm:$0xf]
        %v313 = vld [vmem:[%s262 + $0x38] sm:$0xf]
        %v314 = vld [vmem:[%s262 + $0x3c] sm:$0xf]
        %v315 = vld [vmem:[%s262 + $0x40] sm:$0xf]
        %v316 = vld [vmem:[%s262 + $0x44] sm:$0xf]
        %v317 = vld [vmem:[%s262 + $0x48] sm:$0xf]
        %v318 = vld [vmem:[%s262 + $0x4c] sm:$0xf]
        %v319 = vld [vmem:[%s262 + $0x50] sm:$0xf]
        %v320 = vld [vmem:[%s262 + $0x54] sm:$0xf]
        %v321 = vld [vmem:[%s262 + $0x58] sm:$0xf]
        %v322 = vld [vmem:[%s262 + $0x5c] sm:$0xf]
        %v323 = vld [vmem:[%s262 + $0x60] sm:$0xf]
        %v324 = vld [vmem:[%s262 + $0x64] sm:$0xf]
        %v325 = vld [vmem:[%s262 + $0x68] sm:$0xf]
        %v326 = vld [vmem:[%s262 + $0x6c] sm:$0xf]
        %v327 = vld [vmem:[%s262 + $0x70] sm:$0xf]
        %v328 = vld [vmem:[%s262 + $0x74] sm:$0xf]
        %v329 = vld [vmem:[%s262 + $0x78] sm:$0xf]
        %v330 = vld [vmem:[%s262 + $0x7c] sm:$0xf]
        %v331 = vld [vmem:[#allocation5] sm:$0xf]
        %v332 = vld [vmem:[#allocation5 + $0x4] sm:$0xf]
        %v333 = vld [vmem:[#allocation5 + $0x8] sm:$0xf]
        %v334 = vld [vmem:[#allocation5 + $0xc] sm:$0xf]
        %v335 = vld [vmem:[#allocation5 + $0x10] sm:$0xf]
        %v336 = vld [vmem:[#allocation5 + $0x14] sm:$0xf]
        %v337 = vld [vmem:[#allocation5 + $0x18] sm:$0xf]
        %v338 = vld [vmem:[#allocation5 + $0x1c] sm:$0xf]
        %v339 = vld [vmem:[#allocation5 + $0x20] sm:$0xf]
        %v340 = vld [vmem:[#allocation5 + $0x24] sm:$0xf]
        %v341 = vld [vmem:[#allocation5 + $0x28] sm:$0xf]
        %v342 = vld [vmem:[#allocation5 + $0x2c] sm:$0xf]
        %v343 = vld [vmem:[#allocation5 + $0x30] sm:$0xf]
        %v344 = vld [vmem:[#allocation5 + $0x34] sm:$0xf]
        %v345 = vld [vmem:[#allocation5 + $0x38] sm:$0xf]
        %v346 = vld [vmem:[#allocation5 + $0x3c] sm:$0xf]
        %v347 = vld [vmem:[%s2] sm:$0x1]
        %v349 = vlaneseq
        %v350 = vshrl.u32 %v349, 7
        %v351 = vsub.s32 0, %v350
        %v352 = vrot.slane %v347, %v351
        %v386 = vunpack.c.l.b16 %v299
        %v387 = vunpack.c.l.b16 %v300
        %v388 = vunpack.c.l.b16 %v301
        %v389 = vunpack.c.l.b16 %v302
        %v390 = vunpack.c.l.b16 %v303
        %v391 = vunpack.c.l.b16 %v304
        %v392 = vunpack.c.l.b16 %v305
        %v393 = vunpack.c.l.b16 %v306
        %v394 = vunpack.c.l.b16 %v307
        %v395 = vunpack.c.l.b16 %v308
        %v396 = vunpack.c.l.b16 %v309
        %v397 = vunpack.c.l.b16 %v310
        %v398 = vunpack.c.l.b16 %v311
        %v399 = vunpack.c.l.b16 %v312
        %v400 = vunpack.c.l.b16 %v313
        %v401 = vunpack.c.l.b16 %v314
        %v402 = vunpack.c.l.b16 %v315
        %v403 = vunpack.c.l.b16 %v316
        %v404 = vunpack.c.l.b16 %v317
        %v405 = vunpack.c.l.b16 %v318
        %v406 = vunpack.c.l.b16 %v319
        %v407 = vunpack.c.l.b16 %v320
        %v408 = vunpack.c.l.b16 %v321
        %v409 = vunpack.c.l.b16 %v322
        %v410 = vunpack.c.l.b16 %v323
        %v411 = vunpack.c.l.b16 %v324
        %v412 = vunpack.c.l.b16 %v325
        %v413 = vunpack.c.l.b16 %v326
        %v414 = vunpack.c.l.b16 %v327
        %v415 = vunpack.c.l.b16 %v328
        %v416 = vunpack.c.l.b16 %v329
        %v417 = vunpack.c.l.b16 %v330
        %v418 = vpack.c.b16 %v387, %v386
        %v419 = vpack.c.b16 %v389, %v388
        %v420 = vpack.c.b16 %v391, %v390
        %v421 = vpack.c.b16 %v393, %v392
        %v422 = vpack.c.b16 %v395, %v394
        %v423 = vpack.c.b16 %v397, %v396
        %v424 = vpack.c.b16 %v399, %v398
        %v425 = vpack.c.b16 %v401, %v400
        %v426 = vpack.c.b16 %v403, %v402
        %v427 = vpack.c.b16 %v405, %v404
        %v428 = vpack.c.b16 %v407, %v406
        %v429 = vpack.c.b16 %v409, %v408
        %v430 = vpack.c.b16 %v411, %v410
        %v431 = vpack.c.b16 %v413, %v412
        %v432 = vpack.c.b16 %v415, %v414
        %v433 = vpack.c.b16 %v417, %v416
        %v466 = vunpack.c.l.b16 %v331
        %v467 = vunpack.c.l.b16 %v332
        %v468 = vunpack.c.l.b16 %v333
        %v469 = vunpack.c.l.b16 %v334
        %v470 = vunpack.c.l.b16 %v335
        %v471 = vunpack.c.l.b16 %v336
        %v472 = vunpack.c.l.b16 %v337
        %v473 = vunpack.c.l.b16 %v338
        %v474 = vunpack.c.l.b16 %v339
        %v475 = vunpack.c.l.b16 %v340
        %v476 = vunpack.c.l.b16 %v341
        %v477 = vunpack.c.l.b16 %v342
        %v478 = vunpack.c.l.b16 %v343
        %v479 = vunpack.c.l.b16 %v344
        %v480 = vunpack.c.l.b16 %v345
        %v481 = vunpack.c.l.b16 %v346
        %v482 = vpack.c.b16 %v467, %v466
        %v483 = vpack.c.b16 %v469, %v468
        %v484 = vpack.c.b16 %v471, %v470
        %v485 = vpack.c.b16 %v473, %v472
        %v486 = vpack.c.b16 %v475, %v474
        %v487 = vpack.c.b16 %v477, %v476
        %v488 = vpack.c.b16 %v479, %v478
        %v489 = vpack.c.b16 %v481, %v480
        %498 = vmatprep.subr.bf16.mxu0 0
        %499 = vmatpush1.bf16.msra.mxu0 %v482
        %500 = vmatprep.subr.bf16.mxu0 0
        %501 = vmatpush1.bf16.msra.mxu0 %v483
        %502 = vmatprep.subr.bf16.mxu0 0
        %503 = vmatpush1.bf16.msra.mxu0 %v484
        %504 = vmatprep.subr.bf16.mxu0 0
        %505 = vmatpush1.bf16.msra.mxu0 %v485
        %506 = vmatprep.subr.bf16.mxu0 0
        %507 = vmatpush1.bf16.msra.mxu0 %v486
        %508 = vmatprep.subr.bf16.mxu0 0
        %509 = vmatpush1.bf16.msra.mxu0 %v487
        %510 = vmatprep.subr.bf16.mxu0 0
        %511 = vmatpush1.bf16.msra.mxu0 %v488
        %512 = vmatprep.subr.bf16.mxu0 0
        %513 = vmatpush1.bf16.msra.mxu0 %v489
        %514 = vmatprep.subr.bf16.mxu0 0
        %515 = vmatpush1.bf16.msra.mxu0 0
        %516 = vmatprep.subr.bf16.mxu0 0
        %517 = vmatpush1.bf16.msra.mxu0 0
        %518 = vmatprep.subr.bf16.mxu0 0
        %519 = vmatpush1.bf16.msra.mxu0 0
        %520 = vmatprep.subr.bf16.mxu0 0
        %521 = vmatpush1.bf16.msra.mxu0 0
        %522 = vmatprep.subr.bf16.mxu0 0
        %523 = vmatpush1.bf16.msra.mxu0 0
        %524 = vmatprep.subr.bf16.mxu0 0
        %525 = vmatpush1.bf16.msra.mxu0 0
        %526 = vmatprep.subr.bf16.mxu0 0
        %527 = vmatpush1.bf16.msra.mxu0 0
        %528 = vmatprep.subr.bf16.mxu0 0
        %529 = vmatpush1.bf16.msra.mxu0 0
        %530 = vmatprep.mubr.bf16.mxu0 0
        %531 = vmatmul.mubr.bf16.gmra.mrb[0].mxu0 %v418
        %v532 = vpop.f32.mrb[0].mxu0
        %v533 = vadd.f32 %v352, %v532
        %v534 = vpop.f32.mrb[0].mxu0
        %v535 = vpop.f32.mrb[0].mxu0
        %v536 = vadd.f32 %v352, %v535
        %v537 = vpop.f32.mrb[0].mxu0
        %538 = vmatprep.mubr.bf16.mxu0 0
        %539 = vmatmul.mubr.bf16.gmra.mrb[0].mxu0 %v419
        %v540 = vpop.f32.mrb[0].mxu0
        %v541 = vadd.f32 %v352, %v540
        %v542 = vpop.f32.mrb[0].mxu0
        %v543 = vpop.f32.mrb[0].mxu0
        %v544 = vadd.f32 %v352, %v543
        %v545 = vpop.f32.mrb[0].mxu0
        %546 = vmatprep.mubr.bf16.mxu0 0
        %547 = vmatmul.mubr.bf16.gmra.mrb[0].mxu0 %v420
        %v548 = vpop.f32.mrb[0].mxu0
        %v549 = vadd.f32 %v352, %v548
        %v550 = vpop.f32.mrb[0].mxu0
        %v551 = vpop.f32.mrb[0].mxu0
        %v552 = vadd.f32 %v352, %v551
        %v553 = vpop.f32.mrb[0].mxu0
        %554 = vmatprep.mubr.bf16.mxu0 0
        %555 = vmatmul.mubr.bf16.gmra.mrb[0].mxu0 %v421
        %v556 = vpop.f32.mrb[0].mxu0
        %v557 = vadd.f32 %v352, %v556
        %v558 = vpop.f32.mrb[0].mxu0
        %v559 = vpop.f32.mrb[0].mxu0
        %v560 = vadd.f32 %v352, %v559
        %v561 = vpop.f32.mrb[0].mxu0
        %562 = vmatprep.mubr.bf16.mxu0 0
        %563 = vmatmul.mubr.bf16.gmra.mrb[0].mxu0 %v422
        %v564 = vpop.f32.mrb[0].mxu0
        %v565 = vadd.f32 %v352, %v564
        %v566 = vpop.f32.mrb[0].mxu0
        %v567 = vpop.f32.mrb[0].mxu0
        %v568 = vadd.f32 %v352, %v567
        %v569 = vpop.f32.mrb[0].mxu0
        %570 = vmatprep.mubr.bf16.mxu0 0
        %571 = vmatmul.mubr.bf16.gmra.mrb[0].mxu0 %v423
        %v572 = vpop.f32.mrb[0].mxu0
        %v573 = vadd.f32 %v352, %v572
        %v574 = vpop.f32.mrb[0].mxu0
        %v575 = vpop.f32.mrb[0].mxu0
        %v576 = vadd.f32 %v352, %v575
        %v577 = vpop.f32.mrb[0].mxu0
        %578 = vmatprep.mubr.bf16.mxu0 0
        %579 = vmatmul.mubr.bf16.gmra.mrb[0].mxu0 %v424
        %v580 = vpop.f32.mrb[0].mxu0
        %v581 = vadd.f32 %v352, %v580
        %v582 = vpop.f32.mrb[0].mxu0
        %v583 = vpop.f32.mrb[0].mxu0
        %v584 = vadd.f32 %v352, %v583
        %v585 = vpop.f32.mrb[0].mxu0
        %586 = vmatprep.mubr.bf16.mxu0 0
        %587 = vmatmul.mubr.bf16.gmra.mrb[0].mxu0 %v425
        %v588 = vpop.f32.mrb[0].mxu0
        %v589 = vadd.f32 %v352, %v588
        %v590 = vpop.f32.mrb[0].mxu0
        %v591 = vpop.f32.mrb[0].mxu0
        %v592 = vadd.f32 %v352, %v591
        %v593 = vpop.f32.mrb[0].mxu0
        %594 = vmatprep.mubr.bf16.mxu0 0
        %595 = vmatmul.mubr.bf16.gmra.mrb[0].mxu0 %v426
        %v596 = vpop.f32.mrb[0].mxu0
        %v597 = vadd.f32 %v352, %v596
        %v598 = vpop.f32.mrb[0].mxu0
        %v599 = vpop.f32.mrb[0].mxu0
        %v600 = vadd.f32 %v352, %v599
        %v601 = vpop.f32.mrb[0].mxu0
        %602 = vmatprep.mubr.bf16.mxu0 0
        %603 = vmatmul.mubr.bf16.gmra.mrb[0].mxu0 %v427
        %v604 = vpop.f32.mrb[0].mxu0
        %v605 = vadd.f32 %v352, %v604
        %v606 = vpop.f32.mrb[0].mxu0
        %v607 = vpop.f32.mrb[0].mxu0
        %v608 = vadd.f32 %v352, %v607
        %v609 = vpop.f32.mrb[0].mxu0
        %610 = vmatprep.mubr.bf16.mxu0 0
        %611 = vmatmul.mubr.bf16.gmra.mrb[0].mxu0 %v428
        %v612 = vpop.f32.mrb[0].mxu0
        %v613 = vadd.f32 %v352, %v612
        %v614 = vpop.f32.mrb[0].mxu0
        %v615 = vpop.f32.mrb[0].mxu0
        %v616 = vadd.f32 %v352, %v615
        %v617 = vpop.f32.mrb[0].mxu0
        %618 = vmatprep.mubr.bf16.mxu0 0
        %619 = vmatmul.mubr.bf16.gmra.mrb[0].mxu0 %v429
        %v620 = vpop.f32.mrb[0].mxu0
        %v621 = vadd.f32 %v352, %v620
        %v622 = vpop.f32.mrb[0].mxu0
        %v623 = vpop.f32.mrb[0].mxu0
        %v624 = vadd.f32 %v352, %v623
        %v625 = vpop.f32.mrb[0].mxu0
        %626 = vmatprep.mubr.bf16.mxu0 0
        %627 = vmatmul.mubr.bf16.gmra.mrb[0].mxu0 %v430
        %v628 = vpop.f32.mrb[0].mxu0
        %v629 = vadd.f32 %v352, %v628
        %v630 = vpop.f32.mrb[0].mxu0
        %v631 = vpop.f32.mrb[0].mxu0
        %v632 = vadd.f32 %v352, %v631
        %v633 = vpop.f32.mrb[0].mxu0
        %634 = vmatprep.mubr.bf16.mxu0 0
        %635 = vmatmul.mubr.bf16.gmra.mrb[0].mxu0 %v431
        %v636 = vpop.f32.mrb[0].mxu0
        %v637 = vadd.f32 %v352, %v636
        %v638 = vpop.f32.mrb[0].mxu0
        %v639 = vpop.f32.mrb[0].mxu0
        %v640 = vadd.f32 %v352, %v639
        %v641 = vpop.f32.mrb[0].mxu0
        %642 = vmatprep.mubr.bf16.mxu0 0
        %643 = vmatmul.mubr.bf16.gmra.mrb[0].mxu0 %v432
        %v644 = vpop.f32.mrb[0].mxu0
        %v645 = vadd.f32 %v352, %v644
        %v646 = vpop.f32.mrb[0].mxu0
        %v647 = vpop.f32.mrb[0].mxu0
        %v648 = vadd.f32 %v352, %v647
        %v649 = vpop.f32.mrb[0].mxu0
        %650 = vmatprep.mubr.bf16.mxu0 0
        %651 = vmatmul.mubr.bf16.gmra.mrb[0].mxu0 %v433
        %v652 = vpop.f32.mrb[0].mxu0
        %v653 = vadd.f32 %v352, %v652
        %v654 = vpop.f32.mrb[0].mxu0
        %v655 = vpop.f32.mrb[0].mxu0
        %v656 = vadd.f32 %v352, %v655
        %v657 = vpop.f32.mrb[0].mxu0
        %658 = vdwg.mxu0
        %v659 = vmax.f32 %v533, 0.0
        %v660 = vmax.f32 %v536, 0.0
        %v661 = vmax.f32 %v541, 0.0
        %v662 = vmax.f32 %v544, 0.0
        %v663 = vmax.f32 %v549, 0.0
        %v664 = vmax.f32 %v552, 0.0
        %v665 = vmax.f32 %v557, 0.0
        %v666 = vmax.f32 %v560, 0.0
        %v667 = vmax.f32 %v565, 0.0
        %v668 = vmax.f32 %v568, 0.0
        %v669 = vmax.f32 %v573, 0.0
        %v670 = vmax.f32 %v576, 0.0
        %v671 = vmax.f32 %v581, 0.0
        %v672 = vmax.f32 %v584, 0.0
        %v673 = vmax.f32 %v589, 0.0
        %v674 = vmax.f32 %v592, 0.0
        %v675 = vmax.f32 %v597, 0.0
        %v676 = vmax.f32 %v600, 0.0
        %v677 = vmax.f32 %v605, 0.0
        %v678 = vmax.f32 %v608, 0.0
        %v679 = vmax.f32 %v613, 0.0
        %v680 = vmax.f32 %v616, 0.0
        %v681 = vmax.f32 %v621, 0.0
        %v682 = vmax.f32 %v624, 0.0
        %v683 = vmax.f32 %v629, 0.0
        %v684 = vmax.f32 %v632, 0.0
        %v685 = vmax.f32 %v637, 0.0
        %v686 = vmax.f32 %v640, 0.0
        %v687 = vmax.f32 %v645, 0.0
        %v688 = vmax.f32 %v648, 0.0
        %v689 = vmax.f32 %v653, 0.0
        %v690 = vmax.f32 %v656, 0.0
        %v691 = vld [vmem:[%s3] sm:$0x3]
        %v693 = vlaneseq
        %v694 = vshrl.u32 %v693, 7
        %v695 = vsub.s32 0, %v694
        %v696 = vrot.slane %v691, %v695
        %v697 = vlaneseq
        %v698 = vshrl.u32 %v697, 7
        %v699 = vsub.s32 1, %v698
        %v700 = vrot.slane %v691, %v699
        %703 = vmatprep.subr.mxu0 0.0
        %704 = vmatpush1.msra.mxu0 %v659
        %705 = vmatprep.subr.mxu0 0.0
        %706 = vmatpush1.msra.mxu0 %v660
        %707 = vmatprep.subr.mxu0 0.0
        %708 = vmatpush1.msra.mxu0 %v661
        %709 = vmatprep.subr.mxu0 0.0
        %710 = vmatpush1.msra.mxu0 %v662
        %711 = vmatprep.subr.mxu0 0.0
        %712 = vmatpush1.msra.mxu0 %v663
        %713 = vmatprep.subr.mxu0 0.0
        %714 = vmatpush1.msra.mxu0 %v664
        %715 = vmatprep.subr.mxu0 0.0
        %716 = vmatpush1.msra.mxu0 %v665
        %717 = vmatprep.subr.mxu0 0.0
        %718 = vmatpush1.msra.mxu0 %v666
        %719 = vmatprep.subr.mxu0 0.0
        %720 = vmatpush1.msra.mxu0 %v667
        %721 = vmatprep.subr.mxu0 0.0
        %722 = vmatpush1.msra.mxu0 %v668
        %723 = vmatprep.subr.mxu0 0.0
        %724 = vmatpush1.msra.mxu0 %v669
        %725 = vmatprep.subr.mxu0 0.0
        %726 = vmatpush1.msra.mxu0 %v670
        %727 = vmatprep.subr.mxu0 0.0
        %728 = vmatpush1.msra.mxu0 %v671
        %729 = vmatprep.subr.mxu0 0.0
        %730 = vmatpush1.msra.mxu0 %v672
        %731 = vmatprep.subr.mxu0 0.0
        %732 = vmatpush1.msra.mxu0 %v673
        %733 = vmatprep.subr.mxu0 0.0
        %734 = vmatpush1.msra.mxu0 %v674
        %735 = vmatprep.subr.mxu0 0.0
        %736 = vmatpush1.msra.mxu0 %v675
        %737 = vmatprep.subr.mxu0 0.0
        %738 = vmatpush1.msra.mxu0 %v676
        %739 = vmatprep.subr.mxu0 0.0
        %740 = vmatpush1.msra.mxu0 %v677
        %741 = vmatprep.subr.mxu0 0.0
        %742 = vmatpush1.msra.mxu0 %v678
        %743 = vmatprep.subr.mxu0 0.0
        %744 = vmatpush1.msra.mxu0 %v679
        %745 = vmatprep.subr.mxu0 0.0
        %746 = vmatpush1.msra.mxu0 %v680
        %747 = vmatprep.subr.mxu0 0.0
        %748 = vmatpush1.msra.mxu0 %v681
        %749 = vmatprep.subr.mxu0 0.0
        %750 = vmatpush1.msra.mxu0 %v682
        %751 = vmatprep.subr.mxu0 0.0
        %752 = vmatpush1.msra.mxu0 %v683
        %753 = vmatprep.subr.mxu0 0.0
        %754 = vmatpush1.msra.mxu0 %v684
        %755 = vmatprep.subr.mxu0 0.0
        %756 = vmatpush1.msra.mxu0 %v685
        %757 = vmatprep.subr.mxu0 0.0
        %758 = vmatpush1.msra.mxu0 %v686
        %759 = vmatprep.subr.mxu0 0.0
        %760 = vmatpush1.msra.mxu0 %v687
        %761 = vmatprep.subr.mxu0 0.0
        %762 = vmatpush1.msra.mxu0 %v688
        %763 = vmatprep.subr.mxu0 0.0
        %764 = vmatpush1.msra.mxu0 %v689
        %765 = vmatprep.subr.mxu0 0.0
        %766 = vmatpush1.msra.mxu0 %v690
        %767 = vmatprep.mubr.f32.mxu0 %v700
        %768 = vmatmul.mubr.f32.gmra.mrb[0].mxu0 %v696
        %v769 = vpop.f32.mrb[0].mxu0
        %v770 = vadd.f32 0.0, %v769
        %v771 = vpop.f32.mrb[0].mxu0
        %772 = vdwg.mxu0
        %v773 = vpack.c.bf16 %v770, %v770
        %v774 = vld [vmem:[#allocation7] sm:$0xf]
        %v775 = vld [vmem:[#allocation7 + $0x4] sm:$0xf]
        %v776 = vld [vmem:[#allocation7 + $0x8] sm:$0xf]
        %v777 = vld [vmem:[#allocation7 + $0xc] sm:$0xf]
        %v778 = vld [vmem:[#allocation7 + $0x10] sm:$0xf]
        %v779 = vld [vmem:[#allocation7 + $0x14] sm:$0xf]
        %v780 = vld [vmem:[#allocation7 + $0x18] sm:$0xf]
        %v781 = vld [vmem:[#allocation7 + $0x1c] sm:$0xf]
        %v782 = vld [vmem:[#allocation7 + $0x20] sm:$0xf]
        %v783 = vld [vmem:[#allocation7 + $0x24] sm:$0xf]
        %v784 = vld [vmem:[#allocation7 + $0x28] sm:$0xf]
        %v785 = vld [vmem:[#allocation7 + $0x2c] sm:$0xf]
        %v786 = vld [vmem:[#allocation7 + $0x30] sm:$0xf]
        %v787 = vld [vmem:[#allocation7 + $0x34] sm:$0xf]
        %v788 = vld [vmem:[#allocation7 + $0x38] sm:$0xf]
        %v789 = vld [vmem:[#allocation7 + $0x3c] sm:$0xf]
        %v790 = vld [vmem:[%s5] sm:$0x1]
        %v807 = vunpack.c.l.b16 %v774
        %v808 = vunpack.c.l.b16 %v775
        %v809 = vunpack.c.l.b16 %v776
        %v810 = vunpack.c.l.b16 %v777
        %v811 = vunpack.c.l.b16 %v778
        %v812 = vunpack.c.l.b16 %v779
        %v813 = vunpack.c.l.b16 %v780
        %v814 = vunpack.c.l.b16 %v781
        %v815 = vunpack.c.l.b16 %v782
        %v816 = vunpack.c.l.b16 %v783
        %v817 = vunpack.c.l.b16 %v784
        %v818 = vunpack.c.l.b16 %v785
        %v819 = vunpack.c.l.b16 %v786
        %v820 = vunpack.c.l.b16 %v787
        %v821 = vunpack.c.l.b16 %v788
        %v822 = vunpack.c.l.b16 %v789
        %v823 = vpack.c.b16 %v808, %v807
        %v824 = vpack.c.b16 %v810, %v809
        %v825 = vpack.c.b16 %v812, %v811
        %v826 = vpack.c.b16 %v814, %v813
        %v827 = vpack.c.b16 %v816, %v815
        %v828 = vpack.c.b16 %v818, %v817
        %v829 = vpack.c.b16 %v820, %v819
        %v830 = vpack.c.b16 %v822, %v821
        %839 = vmatprep.subr.bf16.mxu0 0
        %840 = vmatpush1.bf16.msra.mxu0 %v823
        %841 = vmatprep.subr.bf16.mxu0 0
        %842 = vmatpush1.bf16.msra.mxu0 %v824
        %843 = vmatprep.subr.bf16.mxu0 0
        %844 = vmatpush1.bf16.msra.mxu0 %v825
        %845 = vmatprep.subr.bf16.mxu0 0
        %846 = vmatpush1.bf16.msra.mxu0 %v826
        %847 = vmatprep.subr.bf16.mxu0 0
        %848 = vmatpush1.bf16.msra.mxu0 %v827
        %849 = vmatprep.subr.bf16.mxu0 0
        %850 = vmatpush1.bf16.msra.mxu0 %v828
        %851 = vmatprep.subr.bf16.mxu0 0
        %852 = vmatpush1.bf16.msra.mxu0 %v829
        %853 = vmatprep.subr.bf16.mxu0 0
        %854 = vmatpush1.bf16.msra.mxu0 %v830
        %855 = vmatprep.subr.bf16.mxu0 0
        %856 = vmatpush1.bf16.msra.mxu0 0
        %857 = vmatprep.subr.bf16.mxu0 0
        %858 = vmatpush1.bf16.msra.mxu0 0
        %859 = vmatprep.subr.bf16.mxu0 0
        %860 = vmatpush1.bf16.msra.mxu0 0
        %861 = vmatprep.subr.bf16.mxu0 0
        %862 = vmatpush1.bf16.msra.mxu0 0
        %863 = vmatprep.subr.bf16.mxu0 0
        %864 = vmatpush1.bf16.msra.mxu0 0
        %865 = vmatprep.subr.bf16.mxu0 0
        %866 = vmatpush1.bf16.msra.mxu0 0
        %867 = vmatprep.subr.bf16.mxu0 0
        %868 = vmatpush1.bf16.msra.mxu0 0
        %869 = vmatprep.subr.bf16.mxu0 0
        %870 = vmatpush1.bf16.msra.mxu0 0
        %871 = vmatprep.mubr.bf16.mxu0 0
        %872 = vmatmul.mubr.bf16.gmra.mrb[0].mxu0 %v773
        %v873 = vpop.f32.mrb[0].mxu0
        %v874 = vadd.f32 %v790, %v873
        %v875 = vpop.f32.mrb[0].mxu0
        %v876 = vpop.f32.mrb[0].mxu0
        %v877 = vpop.f32.mrb[0].mxu0
        %878 = vdwg.mxu0
        %879 = vst [vmem:[%s297] sm:$0x1] %v874
        %s880 = sand.u32 %s163, 1
        %s881 = scalar_lea.sflag [#allocation4], %s880
        %s882 = sand.u32 %s163, 1
        %s883 = scalar_lea.vmem [#allocation8], %s882
        // Predicated region
        $region57: #{tpu_custom_call.1} parent=43 // pred_check
          %p884 = pneg %p173
        $region58: #{tpu_custom_call.1} parent=43 // pred_check_branch
          %886 = sbr.rel (%p884) target = $region60
        $region59: #{tpu_custom_call.1} parent=43 // pred_region
          %s888 = ssub.s32 16, 16
          %889 = vsyncadd %s881, %s888
          %s890 = smul.addr %s24, 16
          %s891 = scalar_lea.hbm %s6, %s890
          %s893 = sshll.u32 %s883, 4
          %s894 = int_to_ptr.vmem [resolvable:$true] %s893
          %896 = dma.vmem_to_hbm [thread:$0]  %s894, 16, %s891, %s881
        $region60: #{tpu_custom_call.1} parent=43 // pred_fallthru
          _
      $region44: #{tpu_custom_call.1} parent=5 // pred_fallthru
        _
      %p897 = scmp.le.s32.totalorder 2, %s19
      // Predicated region
      $region61: #{tpu_custom_call.1} parent=5 // pred_check
        %p898 = pneg %p897
      $region62: #{tpu_custom_call.1} parent=5 // pred_check_branch
        %900 = sbr.rel (%p898) target = $region64
      $region63: #{tpu_custom_call.1} parent=5 // pred_region
        %s901 = ssub.s32 %s19, 2
        // Predicated region
        $region65: #{tpu_custom_call.1} parent=63 // pred_check
          %p902 = pneg %p179
        $region66: #{tpu_custom_call.1} parent=63 // pred_check_branch
          %904 = sbr.rel (%p902) target = $region68
        $region67: #{tpu_custom_call.1} parent=63 // pred_region
          %s905 = sand.u32 %s164, 1
          %s906 = scalar_lea.sflag [#allocation4], %s905
          %s907 = sand.u32 %s164, 1
          %s908 = scalar_lea.vmem [#allocation8], %s907
          %909 = dma.done %s906, 16
        $region68: #{tpu_custom_call.1} parent=63 // pred_fallthru
          _
      $region64: #{tpu_custom_call.1} parent=5 // pred_fallthru
        _
    $region6: #{tpu_custom_call.1} parent=1 // loop_footer
      %s23 = sadd.s32 1, %s19
    $region7: #{tpu_custom_call.1} parent=1 // loop_footer_branch
      %18 = sbr.rel target = $region3
    $region8: #{tpu_custom_call.1} parent=1 // loop_exit
      _
    %910 = vsyncpa [#allocation3], 1
    %s911 = scalar_lea.sflag [#allocation3], 1
    %912 = vsyncpa %s911, 1
    %913 = vsyncpa [#allocation6], 1
    %914 = vsyncpa [#allocation4], 1
    %s915 = scalar_lea.sflag [#allocation4], 1
    %916 = vsyncpa %s915, 1

</llo_original>
